<compile_context>
chip_gen: v5e
topology: v5e:2x2
jax: 0.10.0
libtpu: 0.0.40
codegen_flags: <defaults>
</compile_context>

<pallas_src>
import functools

import jax
import jax.numpy as jnp
import numpy as np
from jax.experimental import pallas as pl
from jax.experimental.pallas import tpu as pltpu


def _temporal_attention_kernel(x_ref, wqkv_ref, bqkv_ref, wp_ref, bp_ref,
                               o_ref, *, approx_recip):
    """One grid step processes a (Bb, T, C) slab (NTC layout, C lane-dense)."""
    x = x_ref[...]                                       # (Bb, T, C) fp32
    Bb, T, C = x.shape

    # Merge leading dims only (layout-preserving): each 1x1 conv becomes a
    # single (Bb*T, C) @ (C, .) MXU matmul with bf16 operands / fp32 accum.
    xt = x.reshape(Bb * T, C).astype(jnp.bfloat16)

    # Fused Q|K|V projection.  Softmax scale is already folded into the Q
    # slice of wqkv/bqkv at prep time.  Single fp32->bf16 cast after the
    # fp32 bias add (shortest live ranges, one pack op).
    qkv = (jnp.dot(xt, wqkv_ref[...], preferred_element_type=jnp.float32)
           + bqkv_ref[...]).astype(jnp.bfloat16)         # (Bb*T, 3C)
    qkv = qkv.reshape(Bb, T, 3 * C)
    q = qkv[:, :, :C]
    k = qkv[:, :, C:2 * C]
    v = qkv[:, :, 2 * C:]

    # attn[b, i, j] = sum_c q[b, i, c] * k[b, j, c]  (contraction on channels,
    # no materialized k^T).
    # TODO(synk): for small T at large Bb, a single masked (Bb*T, Bb*T) block
    # matmul would fill the MXU better than Bb tiny batched matmuls.
    s = jnp.einsum("bic,bjc->bij", q, k,
                   preferred_element_type=jnp.float32)   # (Bb, T, T) fp32

    # Numerically-stable softmax, all fp32 (v5e VPU/EUP have no bf16 path).
    s = s - jnp.max(s, axis=-1, keepdims=True)
    p = jnp.exp(s)
    denom = jnp.sum(p, axis=-1, keepdims=True)
    if approx_recip:
        p = p * pl.reciprocal(denom, approx=True)        # EUP vrcp slot
    else:
        p = p / denom                                    # exact (validation)
    p = p.astype(jnp.bfloat16)

    # out[b, i, c] = sum_j attn[b, i, j] * v[b, j, c]
    out = jnp.einsum("bij,bjc->bic", p, v,
                     preferred_element_type=jnp.float32) # (Bb, T, C) fp32
    out = out.reshape(Bb * T, C).astype(jnp.bfloat16)

    # Output projection + residual, fp32; store stays NTC (lane-dense in C).
    y = (jnp.dot(out, wp_ref[...], preferred_element_type=jnp.float32)
         + bp_ref[...]).reshape(Bb, T, C)
    o_ref[...] = (y + x).astype(o_ref.dtype)


def _choose_batch_block(B, T, *, target_rows=256):
    """Pick Bb: >=2 grid steps when B allows (v7x megacore) and Bb*T >= 256
    when possible (v6e/v7x MXU row tile; 128 suffices on v5e)."""
    max_bb = B // 2 if B >= 2 else B
    divisors = [d for d in range(1, max_bb + 1) if B % d == 0]
    good = [d for d in divisors if d * T >= target_rows]
    return min(good) if good else max(divisors)


def temporal_attention(x_bct, params, *, batch_block=None, approx_recip=True):
    """x_bct: (B, C, T) float32, same layout as the PyTorch module."""
    B, C, T = x_bct.shape
    scale = float(C) ** -0.5

    Bb = _choose_batch_block(B, T) if batch_block is None else min(batch_block, B)
    assert B % Bb == 0, "batch must be divisible by the batch block"

    def prep_w(w, s=1.0):
        # Conv1d weight (C_out, C_in, 1) -> pre-transposed (C_in, C_out) bf16.
        return (jnp.transpose(w[:, :, 0], (1, 0)) * s).astype(jnp.bfloat16)

    def prep_b(b, s=1.0):
        return (b * s).astype(jnp.float32)

    # Fused Q|K|V weight/bias; softmax scale folded into the whole Q path
    # (softmax(s*(Wq x + bq)^T k) == softmax(((s*Wq)x + s*bq)^T k)).
    wqkv = jnp.concatenate([prep_w(params["wq"], scale),
                            prep_w(params["wk"]),
                            prep_w(params["wv"])], axis=1)          # (C, 3C)
    bqkv = jnp.concatenate([prep_b(params["bq"], scale),
                            prep_b(params["bk"]),
                            prep_b(params["bv"])]).reshape(1, 3 * C)
    wp = prep_w(params["wp"])                                       # (C, C)
    bp = prep_b(params["bp"]).reshape(1, C)

    # Single NCW -> NTC relayout in XLA; kernel is NTC end-to-end.
    x_ntc = jnp.transpose(x_bct, (0, 2, 1))                         # (B, T, C)

    # Constant index_maps: weights/biases are DMA'd once per buffer.  At this
    # C their double-buffering is ~13 KiB; at production C single-buffer them
    # (pipeline_mode=pl.Buffered(1)) or preload to VMEM scratch.
    wqkv_spec = pl.BlockSpec((C, 3 * C), lambda b: (0, 0))
    bqkv_spec = pl.BlockSpec((1, 3 * C), lambda b: (0, 0))
    wp_spec = pl.BlockSpec((C, C), lambda b: (0, 0))
    bp_spec = pl.BlockSpec((1, C), lambda b: (0, 0))
    x_spec = pl.BlockSpec((Bb, T, C), lambda b: (b, 0, 0))

    kernel = functools.partial(_temporal_attention_kernel,
                               approx_recip=approx_recip)

    y_ntc = pl.pallas_call(
        kernel,
        out_shape=jax.ShapeDtypeStruct((B, T, C), x_bct.dtype),
        grid_spec=pltpu.PrefetchScalarGridSpec(
            num_scalar_prefetch=0,
            grid=(B // Bb,),
            in_specs=[x_spec, wqkv_spec, bqkv_spec, wp_spec, bp_spec],
            out_specs=x_spec,
        ),
        compiler_params=pltpu.CompilerParams(
            dimension_semantics=("parallel",),      # shardable across v7x TCs
            vmem_limit_bytes=32 * 1024 * 1024),
    )(x_ntc, wqkv, bqkv, wp, bp)

    # NTC -> NCW once in the wrapper (keeps the kernel store lane-dense).
    return jnp.transpose(y_ntc, (0, 2, 1))


def _reference(x_bct, params):
    """Plain-JAX fp32 reference mirroring the PyTorch forward exactly."""
    scale = float(x_bct.shape[1]) ** -0.5

    def conv1x1(x, w, b):  # x: (B, C, T), w: (C, C, 1), b: (C,)
        return jnp.einsum("oc,bct->bot", w[:, :, 0], x) + b[None, :, None]

    q = conv1x1(x_bct, params["wq"], params["bq"])
    k = conv1x1(x_bct, params["wk"], params["bk"])
    v = conv1x1(x_bct, params["wv"], params["bv"])
    attn = jnp.einsum("bci,bcj->bij", q, k) * scale
    attn = jax.nn.softmax(attn, axis=-1)
    out = jnp.einsum("bcj,bij->bci", v, attn)
    out = conv1x1(out, params["wp"], params["bp"])
    return out + x_bct


def _init_params(key, dim):
    # Deterministic synthetic init (Conv1d(dim, dim, 1): weight (dim,dim,1), bias (dim,))
    ks = jax.random.split(key, 8)
    std = 1.0 / np.sqrt(dim)
    mk = lambda k, shape: jax.random.uniform(k, shape, jnp.float32, -std, std)
    return {
        "wq": mk(ks[0], (dim, dim, 1)), "bq": mk(ks[1], (dim,)),
        "wk": mk(ks[2], (dim, dim, 1)), "bk": mk(ks[3], (dim,)),
        "wv": mk(ks[4], (dim, dim, 1)), "bv": mk(ks[5], (dim,)),
        "wp": mk(ks[6], (dim, dim, 1)), "bp": mk(ks[7], (dim,)),
    }


if __name__ == "__main__":
    B, C, T = 2, 32, 16  # batch=2, dim(channels)=32, seq=16
    key = jax.random.PRNGKey(0)
    kx, kp = jax.random.split(key)
    x = jax.random.normal(kx, (B, C, T), jnp.float32)
    params = _init_params(kp, C)

    y_ref = _reference(x, params)

    # Validation pass with exact softmax division: only bf16-MXU error left,
    # so a tighter tolerance applies.
    y_exact = jax.block_until_ready(
        temporal_attention(x, params, approx_recip=False))
    np.testing.assert_allclose(np.asarray(y_exact), np.asarray(y_ref),
                               rtol=3e-2, atol=3e-2)

    # Fast path (EUP approximate reciprocal in the softmax denominator).
    y = jax.block_until_ready(temporal_attention(x, params))
    np.testing.assert_allclose(np.asarray(y), np.asarray(y_ref),
                               rtol=5e-2, atol=5e-2)

    print("KERNEL_OK")
</pallas_src>

<mosaic_0001>
module attributes {stable_mosaic.version = 11 : i64} {
  func.func @_temporal_attention_kernel(%arg0: i32, %arg1: memref<1x16x32xf32, #tpu.memory_space<vmem>>, %arg2: memref<32x96xbf16, #tpu.memory_space<vmem>>, %arg3: memref<1x96xf32, #tpu.memory_space<vmem>>, %arg4: memref<32x32xbf16, #tpu.memory_space<vmem>>, %arg5: memref<1x32xf32, #tpu.memory_space<vmem>>, %arg6: memref<1x16x32xf32, #tpu.memory_space<vmem>>) attributes {dimension_semantics = [#tpu.dimension_semantics<parallel>], iteration_bounds = array<i64: 2>, scalar_prefetch = 0 : i64, scratch_operands = 0 : i64, tpu.core_type = #tpu.core_type<tc>, window_params = [{transform_indices = @transform_0, window_bounds = array<i64: 1, 16, 32>}, {pipeline_mode = #tpu.pipeline_mode<synchronous>, transform_indices = @transform_1, window_bounds = array<i64: 32, 96>}, {pipeline_mode = #tpu.pipeline_mode<synchronous>, transform_indices = @transform_2, window_bounds = array<i64: 1, 96>}, {pipeline_mode = #tpu.pipeline_mode<synchronous>, transform_indices = @transform_3, window_bounds = array<i64: 32, 32>}, {pipeline_mode = #tpu.pipeline_mode<synchronous>, transform_indices = @transform_4, window_bounds = array<i64: 1, 32>}, {transform_indices = @transform_5, window_bounds = array<i64: 1, 16, 32>}]} {
    %c0 = arith.constant 0 : index
    %c0_0 = arith.constant 0 : index
    %c0_1 = arith.constant 0 : index
    %0 = vector.load %arg1[%c0, %c0_0, %c0_1] : memref<1x16x32xf32, #tpu.memory_space<vmem>>, vector<1x16x32xf32>
    %1 = vector.shape_cast %0 : vector<1x16x32xf32> to vector<16x32xf32>
    %2 = arith.truncf %1 : vector<16x32xf32> to vector<16x32xbf16>
    %c0_2 = arith.constant 0 : index
    %c0_3 = arith.constant 0 : index
    %3 = vector.load %arg2[%c0_2, %c0_3] : memref<32x96xbf16, #tpu.memory_space<vmem>>, vector<32x96xbf16>
    %cst = arith.constant dense<0.000000e+00> : vector<16x96xf32>
    %4 = tpu.matmul %2, %3, %cst {dimension_numbers = #tpu.dot_dimension_numbers<[1], [0], [0], [1], [0, 0, 1, 1], [], []>} : vector<16x32xbf16>, vector<32x96xbf16>, vector<16x96xf32> -> vector<16x96xf32>
    %c0_4 = arith.constant 0 : index
    %c0_5 = arith.constant 0 : index
    %5 = vector.load %arg3[%c0_4, %c0_5] : memref<1x96xf32, #tpu.memory_space<vmem>>, vector<1x96xf32>
    %6 = vector.broadcast %5 : vector<1x96xf32> to vector<16x96xf32>
    %7 = arith.addf %4, %6 : vector<16x96xf32>
    %8 = arith.truncf %7 : vector<16x96xf32> to vector<16x96xbf16>
    %9 = vector.shape_cast %8 : vector<16x96xbf16> to vector<1x16x96xbf16>
    %10 = vector.extract_strided_slice %9 {offsets = [0, 0, 0], sizes = [1, 16, 32], strides = [1, 1, 1]} : vector<1x16x96xbf16> to vector<1x16x32xbf16>
    %11 = vector.extract_strided_slice %9 {offsets = [0, 0, 32], sizes = [1, 16, 32], strides = [1, 1, 1]} : vector<1x16x96xbf16> to vector<1x16x32xbf16>
    %12 = vector.extract_strided_slice %9 {offsets = [0, 0, 64], sizes = [1, 16, 32], strides = [1, 1, 1]} : vector<1x16x96xbf16> to vector<1x16x32xbf16>
    "tpu.trace_start"() <{level = 10 : i32, message = "bic,bjc->bij"}> : () -> ()
    %cst_6 = arith.constant dense<0.000000e+00> : vector<1x16x16xf32>
    %13 = tpu.matmul %10, %11, %cst_6 {dimension_numbers = #tpu.dot_dimension_numbers<[2], [2], [1], [1], [0, 0, 0, 1, 1, 1], [0], [0]>} : vector<1x16x32xbf16>, vector<1x16x32xbf16>, vector<1x16x16xf32> -> vector<1x16x16xf32>
    "tpu.trace_stop"() : () -> ()
    %cst_7 = arith.constant dense<0xFF800000> : vector<1x16xf32>
    %14 = vector.multi_reduction <maximumf>, %13, %cst_7 [2] : vector<1x16x16xf32> to vector<1x16xf32>
    %15 = vector.shape_cast %14 : vector<1x16xf32> to vector<1x16x1xf32>
    %16 = vector.broadcast %15 : vector<1x16x1xf32> to vector<1x16x16xf32>
    %17 = arith.subf %13, %16 : vector<1x16x16xf32>
    %18 = math.exp %17 : vector<1x16x16xf32>
    %cst_8 = arith.constant dense<0.000000e+00> : vector<1x16xf32>
    %19 = vector.multi_reduction <add>, %18, %cst_8 [2] : vector<1x16x16xf32> to vector<1x16xf32>
    %20 = vector.shape_cast %19 : vector<1x16xf32> to vector<1x16x1xf32>
    %21 = vector.broadcast %20 : vector<1x16x1xf32> to vector<1x16x16xf32>
    %22 = arith.divf %18, %21 : vector<1x16x16xf32>
    %23 = arith.truncf %22 : vector<1x16x16xf32> to vector<1x16x16xbf16>
    "tpu.trace_start"() <{level = 10 : i32, message = "bij,bjc->bic"}> : () -> ()
    %cst_9 = arith.constant dense<0.000000e+00> : vector<1x16x32xf32>
    %24 = tpu.matmul %23, %12, %cst_9 {dimension_numbers = #tpu.dot_dimension_numbers<[2], [1], [1], [2], [0, 0, 0, 1, 1, 2], [0], [0]>} : vector<1x16x16xbf16>, vector<1x16x32xbf16>, vector<1x16x32xf32> -> vector<1x16x32xf32>
    "tpu.trace_stop"() : () -> ()
    %25 = vector.shape_cast %24 : vector<1x16x32xf32> to vector<16x32xf32>
    %26 = arith.truncf %25 : vector<16x32xf32> to vector<16x32xbf16>
    %c0_10 = arith.constant 0 : index
    %c0_11 = arith.constant 0 : index
    %27 = vector.load %arg4[%c0_10, %c0_11] : memref<32x32xbf16, #tpu.memory_space<vmem>>, vector<32x32xbf16>
    %cst_12 = arith.constant dense<0.000000e+00> : vector<16x32xf32>
    %28 = tpu.matmul %26, %27, %cst_12 {dimension_numbers = #tpu.dot_dimension_numbers<[1], [0], [0], [1], [0, 0, 1, 1], [], []>} : vector<16x32xbf16>, vector<32x32xbf16>, vector<16x32xf32> -> vector<16x32xf32>
    %c0_13 = arith.constant 0 : index
    %c0_14 = arith.constant 0 : index
    %29 = vector.load %arg5[%c0_13, %c0_14] : memref<1x32xf32, #tpu.memory_space<vmem>>, vector<1x32xf32>
    %30 = vector.broadcast %29 : vector<1x32xf32> to vector<16x32xf32>
    %31 = arith.addf %28, %30 : vector<16x32xf32>
    %32 = vector.shape_cast %31 : vector<16x32xf32> to vector<1x16x32xf32>
    %33 = arith.addf %32, %0 : vector<1x16x32xf32>
    %c0_15 = arith.constant 0 : index
    %c0_16 = arith.constant 0 : index
    %c0_17 = arith.constant 0 : index
    %34 = vector.load %arg6[%c0_15, %c0_16, %c0_17] : memref<1x16x32xf32, #tpu.memory_space<vmem>>, vector<1x16x32xf32>
    tpu.vector_store %arg6[%c0_15, %c0_16, %c0_17], %33 {strides = array<i32>} : memref<1x16x32xf32, #tpu.memory_space<vmem>>, vector<1x16x32xf32>,
    return
  }
  func.func @transform_0(%arg0: i32) -> (i32, i32, i32) {
    %c0_i32 = arith.constant 0 : i32
    %c0_i32_0 = arith.constant 0 : i32
    %c0_i32_1 = arith.constant 0 : i32
    return %arg0, %c0_i32, %c0_i32_0 : i32, i32, i32
  }
  func.func @transform_1(%arg0: i32) -> (i32, i32) {
    %c0_i32 = arith.constant 0 : i32
    %c0_i32_0 = arith.constant 0 : i32
    %c0_i32_1 = arith.constant 0 : i32
    return %c0_i32, %c0_i32_0 : i32, i32
  }
  func.func @transform_2(%arg0: i32) -> (i32, i32) {
    %c0_i32 = arith.constant 0 : i32
    %c0_i32_0 = arith.constant 0 : i32
    %c0_i32_1 = arith.constant 0 : i32
    return %c0_i32, %c0_i32_0 : i32, i32
  }
  func.func @transform_3(%arg0: i32) -> (i32, i32) {
    %c0_i32 = arith.constant 0 : i32
    %c0_i32_0 = arith.constant 0 : i32
    %c0_i32_1 = arith.constant 0 : i32
    return %c0_i32, %c0_i32_0 : i32, i32
  }
  func.func @transform_4(%arg0: i32) -> (i32, i32) {
    %c0_i32 = arith.constant 0 : i32
    %c0_i32_0 = arith.constant 0 : i32
    %c0_i32_1 = arith.constant 0 : i32
    return %c0_i32, %c0_i32_0 : i32, i32
  }
  func.func @transform_5(%arg0: i32) -> (i32, i32, i32) {
    %c0_i32 = arith.constant 0 : i32
    %c0_i32_0 = arith.constant 0 : i32
    %c0_i32_1 = arith.constant 0 : i32
    return %arg0, %c0_i32, %c0_i32_0 : i32, i32, i32
  }
}

</mosaic_0001>

<llo_original>
// kernel: tpu_custom_call.1
$region0: #{tpu_custom_call.1}
  #allocation0 [shape = 'u32[]', space=smem, size = 0x4, offset = 0x4, fixed_abs, tag = 'smem constant byte address 0x4 - core index']
  #allocation1 [shape = 'u32[72,128]{1,0:T(1,128)}', space=vmem, size = 0x9000, scoped, tag = 'internal scratch']
  %s0 = inlined_call_operand.hbm [shape: f32[2,16,32], index: 0, kind: input, shape index: {}]
  %s1 = inlined_call_operand.hbm [shape: bf16[32,96], index: 1, kind: input, shape index: {}]
  %s2 = inlined_call_operand.vmem [shape: f32[1,96], index: 2, kind: input, shape index: {}]
  %s3 = inlined_call_operand.hbm [shape: bf16[32,32], index: 3, kind: input, shape index: {}]
  %s4 = inlined_call_operand.vmem [shape: f32[1,32], index: 4, kind: input, shape index: {}]
  %s5 = inlined_call_operand.hbm [shape: f32[2,16,32], index: 5, kind: output, shape index: {}]
  %s6 = sld [smem:[#allocation0]]
  $region65: #{tpu_custom_call.1} parent=0
    _
  %s8 = ssub.s32 1, %s6
  %s9 = scalar_select 0, %s8, %s6
  $region1: #{tpu_custom_call.1} parent=0
    #allocation2 [shape = 'u8[16384]{0}', space=vmem, size = 0x4000, scoped, tag = 'input window, operand 0']
    #allocation3 [shape = 's32[2]{0}', space=sflag, size = 0x8, scoped, tag = 'scoped memory for tpu_custom_call.1']
    #allocation4 [shape = 's32[2]{0}', space=sflag, size = 0x8, scoped, tag = 'scoped memory for tpu_custom_call.1']
    #allocation5 [shape = 'u8[8192]{0}', space=vmem, size = 0x2000, scoped, tag = 'input window, operand 1, single buffered']
    #allocation6 [shape = 's32[1]{0}', space=sflag, size = 0x4, scoped, tag = 'scoped memory for tpu_custom_call.1']
    #allocation7 [shape = 'u8[8192]{0}', space=vmem, size = 0x2000, scoped, tag = 'input window, operand 3, single buffered']
    #allocation8 [shape = 'u8[16384]{0}', space=vmem, size = 0x4000, scoped, tag = 'output window, operand 0']
    %10 = vsyncpa [#allocation3], 0
    %s11 = scalar_lea.sflag [#allocation3], 1
    %12 = vsyncpa %s11, 0
    %13 = vsyncpa [#allocation6], 0
    %14 = vsyncpa [#allocation4], 0
    %s15 = scalar_lea.sflag [#allocation4], 1
    %16 = vsyncpa %s15, 0
    loop: start=0, step=1, limit=4
    $region2: #{tpu_custom_call.1} parent=1 // loop_pre_header
      _
    $region3: #{tpu_custom_call.1} parent=1 // loop_header
      %s18 = sphi 0, %s22
      %p19 = scmp.ge.s32.totalorder %s18, 4
      %s28 = sphi 0, %s30
      %s31 = sphi 0, %s28
      %s32 = sphi 0, %s31
      %s48 = sphi 0, %s32
      %s52 = sphi 0, %s52
      %s54 = sphi 0, %s52
      %s55 = sphi 0, %s54
      %s69 = sphi 0, %s55
      %s73 = sphi 0, %s73
      %s75 = sphi 0, %s73
      %s76 = sphi 0, %s75
      %s90 = sphi 0, %s76
      %s94 = sphi 0, %s94
      %s96 = sphi 0, %s94
      %s97 = sphi 0, %s96
      %s111 = sphi 0, %s97
      %s115 = sphi 0, %s115
      %s117 = sphi 0, %s115
      %s118 = sphi 0, %s117
      %s132 = sphi 0, %s118
      %s138 = sphi 0, %s140
      %s141 = sphi 0, %s138
      %s142 = sphi 0, %s141
      %s158 = sphi 0, %s142
    $region4: #{tpu_custom_call.1} parent=1 // loop_header_branch
      %21 = sbr.rel (%p19) target = $region8
    $region5: #{tpu_custom_call.1} parent=1 // loop_body
      %s23 = ssub.s32 %s18, 1
      %s24 = ssub.s32 %s18, 2
      %s25 = sadd.s32 %s18, 1
      %s26 = ssub.s32 %s18, %s25
      %p27 = scmp.eq.s32.totalorder %s26, 0
      %s29 = sadd.s32 %s28, 1
      %s30 = scalar_select %p27, %s28, %s29
      %p33 = pneg %p27
      %p34 = scmp.eq.s32.totalorder %s18, 1
      %p35 = por %p33, %p34
      %p36 = scmp.ne.s32.totalorder %s28, %s31
      %p37 = scmp.eq.s32.totalorder %s18, 0
      %p38 = por %p36, %p37
      %p39 = scmp.ne.s32.totalorder %s28, %s31
      %p40 = scmp.eq.s32.totalorder %s23, 1
      %p41 = por %p39, %p40
      %p42 = scmp.ne.s32.totalorder %s31, %s32
      %p43 = scmp.eq.s32.totalorder %s23, 0
      %p44 = por %p42, %p43
      %p45 = scmp.ne.s32.totalorder %s31, %s32
      %p46 = scmp.eq.s32.totalorder %s24, 1
      %p47 = por %p45, %p46
      %p49 = scmp.ne.s32.totalorder %s32, %s48
      %p50 = scmp.eq.s32.totalorder %s24, 0
      %p51 = por %p49, %p50
      %s53 = sadd.s32 %s52, 1
      %p56 = scmp.eq.s32.totalorder %s18, 1
      %p57 = scmp.ne.s32.totalorder %s52, %s54
      %p58 = scmp.eq.s32.totalorder %s18, 0
      %p59 = por %p57, %p58
      %p60 = scmp.ne.s32.totalorder %s52, %s54
      %p61 = scmp.eq.s32.totalorder %s23, 1
      %p62 = por %p60, %p61
      %p63 = scmp.ne.s32.totalorder %s54, %s55
      %p64 = scmp.eq.s32.totalorder %s23, 0
      %p65 = por %p63, %p64
      %p66 = scmp.ne.s32.totalorder %s54, %s55
      %p67 = scmp.eq.s32.totalorder %s24, 1
      %p68 = por %p66, %p67
      %p70 = scmp.ne.s32.totalorder %s55, %s69
      %p71 = scmp.eq.s32.totalorder %s24, 0
      %p72 = por %p70, %p71
      %s74 = sadd.s32 %s73, 1
      %p77 = scmp.eq.s32.totalorder %s18, 1
      %p78 = scmp.ne.s32.totalorder %s73, %s75
      %p79 = scmp.eq.s32.totalorder %s18, 0
      %p80 = por %p78, %p79
      %p81 = scmp.ne.s32.totalorder %s73, %s75
      %p82 = scmp.eq.s32.totalorder %s23, 1
      %p83 = por %p81, %p82
      %p84 = scmp.ne.s32.totalorder %s75, %s76
      %p85 = scmp.eq.s32.totalorder %s23, 0
      %p86 = por %p84, %p85
      %p87 = scmp.ne.s32.totalorder %s75, %s76
      %p88 = scmp.eq.s32.totalorder %s24, 1
      %p89 = por %p87, %p88
      %p91 = scmp.ne.s32.totalorder %s76, %s90
      %p92 = scmp.eq.s32.totalorder %s24, 0
      %p93 = por %p91, %p92
      %s95 = sadd.s32 %s94, 1
      %p98 = scmp.eq.s32.totalorder %s18, 1
      %p99 = scmp.ne.s32.totalorder %s94, %s96
      %p100 = scmp.eq.s32.totalorder %s18, 0
      %p101 = por %p99, %p100
      %p102 = scmp.ne.s32.totalorder %s94, %s96
      %p103 = scmp.eq.s32.totalorder %s23, 1
      %p104 = por %p102, %p103
      %p105 = scmp.ne.s32.totalorder %s96, %s97
      %p106 = scmp.eq.s32.totalorder %s23, 0
      %p107 = por %p105, %p106
      %p108 = scmp.ne.s32.totalorder %s96, %s97
      %p109 = scmp.eq.s32.totalorder %s24, 1
      %p110 = por %p108, %p109
      %p112 = scmp.ne.s32.totalorder %s97, %s111
      %p113 = scmp.eq.s32.totalorder %s24, 0
      %p114 = por %p112, %p113
      %s116 = sadd.s32 %s115, 1
      %p119 = scmp.eq.s32.totalorder %s18, 1
      %p120 = scmp.ne.s32.totalorder %s115, %s117
      %p121 = scmp.eq.s32.totalorder %s18, 0
      %p122 = por %p120, %p121
      %p123 = scmp.ne.s32.totalorder %s115, %s117
      %p124 = scmp.eq.s32.totalorder %s23, 1
      %p125 = por %p123, %p124
      %p126 = scmp.ne.s32.totalorder %s117, %s118
      %p127 = scmp.eq.s32.totalorder %s23, 0
      %p128 = por %p126, %p127
      %p129 = scmp.ne.s32.totalorder %s117, %s118
      %p130 = scmp.eq.s32.totalorder %s24, 1
      %p131 = por %p129, %p130
      %p133 = scmp.ne.s32.totalorder %s118, %s132
      %p134 = scmp.eq.s32.totalorder %s24, 0
      %p135 = por %p133, %p134
      %s136 = ssub.s32 %s18, %s25
      %p137 = scmp.eq.s32.totalorder %s136, 0
      %s139 = sadd.s32 %s138, 1
      %s140 = scalar_select %p137, %s138, %s139
      %p143 = pneg %p137
      %p144 = scmp.eq.s32.totalorder %s18, 1
      %p145 = por %p143, %p144
      %p146 = scmp.ne.s32.totalorder %s138, %s141
      %p147 = scmp.eq.s32.totalorder %s18, 0
      %p148 = por %p146, %p147
      %p149 = scmp.ne.s32.totalorder %s138, %s141
      %p150 = scmp.eq.s32.totalorder %s23, 1
      %p151 = por %p149, %p150
      %p152 = scmp.ne.s32.totalorder %s141, %s142
      %p153 = scmp.eq.s32.totalorder %s23, 0
      %p154 = por %p152, %p153
      %p155 = scmp.ne.s32.totalorder %s141, %s142
      %p156 = scmp.eq.s32.totalorder %s24, 1
      %p157 = por %p155, %p156
      %p159 = scmp.ne.s32.totalorder %s142, %s158
      %p160 = scmp.eq.s32.totalorder %s24, 0
      %p161 = por %p159, %p160
      %p162 = scmp.le.s32.totalorder 1, %s18
      %p163 = scmp.lt.s32.totalorder %s18, 3
      %p164 = pnand %p162, %p163
      %p165 = pneg %p164
      // Predicated region
      $region9: #{tpu_custom_call.1} parent=5 // pred_check
        _
      $region10: #{tpu_custom_call.1} parent=5 // pred_check_branch
        %167 = sbr.rel (%p164) target = $region12
      $region11: #{tpu_custom_call.1} parent=5 // pred_region
        %s168 = ssub.s32 %s18, 1
        // Predicated region
        $region13: #{tpu_custom_call.1} parent=11 // pred_check
          %p169 = pneg %p65
        $region14: #{tpu_custom_call.1} parent=11 // pred_check_branch
          %171 = sbr.rel (%p169) target = $region16
        $region15: #{tpu_custom_call.1} parent=11 // pred_region
          %173 = vsyncadd [#allocation6], 0
          %s174 = sshll.u32 %s1, 4
          %s175 = int_to_ptr.hbm [resolvable:$true] %s174
          %s176 = sshll.u32 [#allocation5], 4
          %s177 = int_to_ptr.vmem [resolvable:$true] %s176
          %182 = dma.hbm_to_vmem [thread:$0]  %s175, 256, %s177, [#allocation6], 64, 64, 4
        $region16: #{tpu_custom_call.1} parent=11 // pred_fallthru
          _
        // Predicated region
        $region17: #{tpu_custom_call.1} parent=11 // pred_check
          %p183 = pneg %p86
        $region18: #{tpu_custom_call.1} parent=11 // pred_check_branch
          %185 = sbr.rel (%p183) target = $region20
        $region19: #{tpu_custom_call.1} parent=11 // pred_region
          _
        $region20: #{tpu_custom_call.1} parent=11 // pred_fallthru
          _
        // Predicated region
        $region21: #{tpu_custom_call.1} parent=11 // pred_check
          %p186 = pneg %p107
        $region22: #{tpu_custom_call.1} parent=11 // pred_check_branch
          %188 = sbr.rel (%p186) target = $region24
        $region23: #{tpu_custom_call.1} parent=11 // pred_region
          %190 = vsyncadd [#allocation6], 0
          %s191 = sshll.u32 %s3, 4
          %s192 = int_to_ptr.hbm [resolvable:$true] %s191
          %s193 = sshll.u32 [#allocation7], 4
          %s194 = int_to_ptr.vmem [resolvable:$true] %s193
          %199 = dma.hbm_to_vmem [thread:$0]  %s192, 256, %s194, [#allocation6], 64, 64, 4
        $region24: #{tpu_custom_call.1} parent=11 // pred_fallthru
          _
        // Predicated region
        $region25: #{tpu_custom_call.1} parent=11 // pred_check
          %p200 = pneg %p128
        $region26: #{tpu_custom_call.1} parent=11 // pred_check_branch
          %202 = sbr.rel (%p200) target = $region28
        $region27: #{tpu_custom_call.1} parent=11 // pred_region
          _
        $region28: #{tpu_custom_call.1} parent=11 // pred_fallthru
          _
      $region12: #{tpu_custom_call.1} parent=5 // pred_fallthru
        _
      %p203 = scmp.lt.s32.totalorder %s18, 2
      // Predicated region
      $region29: #{tpu_custom_call.1} parent=5 // pred_check
        %p204 = pneg %p203
      $region30: #{tpu_custom_call.1} parent=5 // pred_check_branch
        %206 = sbr.rel (%p204) target = $region32
      $region31: #{tpu_custom_call.1} parent=5 // pred_region
        // Predicated region
        $region33: #{tpu_custom_call.1} parent=31 // pred_check
          %p207 = pneg %p38
        $region34: #{tpu_custom_call.1} parent=31 // pred_check_branch
          %209 = sbr.rel (%p207) target = $region36
        $region35: #{tpu_custom_call.1} parent=31 // pred_region
          %s210 = sand.u32 %s28, 1
          %s211 = scalar_lea.sflag [#allocation3], %s210
          %s212 = sand.u32 %s28, 1
          %s213 = smul.addr %s212, 16
          %s214 = scalar_lea.vmem [#allocation2], %s213
          %216 = vsyncadd %s211, 0
          %s217 = smul.addr %s18, 2
          %s218 = smul.addr %s217, 8
          %s219 = scalar_lea.hbm %s0, %s218
          %s220 = sshll.u32 %s219, 4
          %s221 = int_to_ptr.hbm [resolvable:$true] %s220
          %s222 = sshll.u32 %s214, 4
          %s223 = int_to_ptr.vmem [resolvable:$true] %s222
          %228 = dma.hbm_to_vmem [thread:$0]  %s221, 256, %s223, %s211, 128, 128, 8
        $region36: #{tpu_custom_call.1} parent=31 // pred_fallthru
          _
      $region32: #{tpu_custom_call.1} parent=5 // pred_fallthru
        _
      %p229 = scmp.le.s32.totalorder 1, %s18
      %p230 = scmp.lt.s32.totalorder %s18, 3
      %p231 = pnand %p229, %p230
      %p232 = pneg %p231
      // Predicated region
      $region37: #{tpu_custom_call.1} parent=5 // pred_check
        _
      $region38: #{tpu_custom_call.1} parent=5 // pred_check_branch
        %234 = sbr.rel (%p231) target = $region40
      $region39: #{tpu_custom_call.1} parent=5 // pred_region
        %s235 = ssub.s32 %s18, 1
        %s236 = sand.u32 %s31, 1
        %s237 = scalar_lea.sflag [#allocation3], %s236
        %s238 = sand.u32 %s31, 1
        %s239 = smul.addr %s238, 16
        %s240 = scalar_lea.vmem [#allocation2], %s239
        // Predicated region
        $region41: #{tpu_custom_call.1} parent=39 // pred_check
          %p241 = pneg %p44
        $region42: #{tpu_custom_call.1} parent=39 // pred_check_branch
          %243 = sbr.rel (%p241) target = $region44
        $region43: #{tpu_custom_call.1} parent=39 // pred_region
          %245 = dma.done %s237, 256
        $region44: #{tpu_custom_call.1} parent=39 // pred_fallthru
          _
        // Predicated region
        $region45: #{tpu_custom_call.1} parent=39 // pred_check
          %p246 = pneg %p65
        $region46: #{tpu_custom_call.1} parent=39 // pred_check_branch
          %248 = sbr.rel (%p246) target = $region48
        $region47: #{tpu_custom_call.1} parent=39 // pred_region
          %250 = dma.done [#allocation6], 256
        $region48: #{tpu_custom_call.1} parent=39 // pred_fallthru
          _
        // Predicated region
        $region49: #{tpu_custom_call.1} parent=39 // pred_check
          %p251 = pneg %p107
        $region50: #{tpu_custom_call.1} parent=39 // pred_check_branch
          %253 = sbr.rel (%p251) target = $region52
        $region51: #{tpu_custom_call.1} parent=39 // pred_region
          %255 = dma.done [#allocation6], 256
        $region52: #{tpu_custom_call.1} parent=39 // pred_fallthru
          _
        %s256 = sand.u32 %s31, 1
        %s257 = scalar_lea.sflag [#allocation3], %s256
        %s258 = sand.u32 %s31, 1
        %s259 = smul.addr %s258, 16
        %s260 = scalar_lea.vmem [#allocation2], %s259
        %p261 = pneg %p44
        %p262 = pneg %p41
        %p263 = pneg %p65
        %p264 = pneg %p62
        %p265 = pneg %p86
        %p266 = pneg %p83
        %p267 = pneg %p107
        %p268 = pneg %p104
        %p269 = pneg %p128
        %p270 = pneg %p125
        %p271 = pneg %p154
        %p272 = pneg %p151
        %s273 = sand.u32 %s141, 1
        %s274 = scalar_lea.sflag [#allocation4], %s273
        %s275 = sand.u32 %s141, 1
        %s276 = smul.addr %s275, 16
        %s277 = scalar_lea.vmem [#allocation8], %s276
        %v279 = vld [vmem:[%s240] sm:$0xff]
        %v280 = vld [vmem:[%s240 + $0x8] sm:$0xff]
        %v281 = vpack.c.bf16 %v280, %v279
        %v282 = vld [vmem:[#allocation5] sm:$0xf]
        %v283 = vld [vmem:[#allocation5 + $0x4] sm:$0xf]
        %v284 = vld [vmem:[#allocation5 + $0x8] sm:$0xf]
        %v285 = vld [vmem:[#allocation5 + $0xc] sm:$0xf]
        %v286 = vld [vmem:[%s2] sm:$0x1]
        %v288 = vperm.slane %v286, 0
        %v294 = vunpack.c.l.b16 %v282
        %v295 = vunpack.c.l.b16 %v283
        %v296 = vunpack.c.l.b16 %v284
        %v297 = vunpack.c.l.b16 %v285
        %v298 = vpack.c.b16 %v295, %v294
        %v299 = vpack.c.b16 %v297, %v296
        %vm302 = vcmask 261120
        %v304 = vsel %vm302, %v281, 0
        %306 = vmatpush.bf16.msra.mxu0 0
        %307 = vmatpush.bf16.msra.mxu0 0
        %308 = vmatpush.bf16.msra.mxu0 0
        %309 = vmatpush.bf16.msra.mxu0 0
        %310 = vmatpush.bf16.msra.mxu0 0
        %311 = vmatpush.bf16.msra.mxu0 0
        %312 = vmatpush.bf16.msra.mxu0 %v299
        %313 = vmatpush.bf16.msra.mxu0 %v298
        %314 = vmatmul.bf16.gmra.mxu0 %v304
        %v315 = vpop.f32.mrf.mxu0
        %v316 = vadd.f32 %v288, %v315
        %v317 = vpop.f32.mrf.mxu0
        %v318 = vadd.f32 %v288, %v317
        %319 = vdwg.mxu0
        %v320 = vpack.c.bf16 %v316, %v316
        %v321 = vpack.c.bf16 %v318, %v318
        %v324 = vunpack.c.l.b16 %v320
        %v325 = vunpack.c.l.b16 %v321
        %v326 = vpack.c.b16 %v325, %v324
        %327 = vrot.lane.b32.xlu0 %v326, 96
        %v328 = vpop.permute.xlu0 %327
        %v330 = vsel %vm302, %v326, 0
        %v333 = vsel %vm302, %v328, 0
        %335 = vmatpush.bf16.xpose.msra.mxu0 0
        %336 = vmatpush.bf16.xpose.msra.mxu0 0
        %337 = vmatpush.bf16.xpose.msra.mxu0 0
        %338 = vmatpush.bf16.xpose.msra.mxu0 0
        %339 = vmatpush.bf16.xpose.msra.mxu0 0
        %340 = vmatpush.bf16.xpose.msra.mxu0 0
        %341 = vmatpush.bf16.xpose.msra.mxu0 0
        %342 = vmatpush.bf16.xpose.msra.mxu0 %v333
        %343 = vmatmul.bf16.gmra.mxu0 %v330
        %v344 = vpop.f32.mrf.mxu0
        %v345 = vadd.f32 0.0, %v344
        %v346 = vpop.f32.mrf.mxu0
        %v347 = vadd.f32 0.0, %v346
        %348 = vdwg.mxu0
        %vm349 = vcmask 130048
        %v350 = vsel %vm349, %v345, -inf
        %351 = vmax.xlane.f32.xlu0 %v350
        %v352 = vpop.xlane.xlu0 %351
        %v353 = vsel %vm349, %v347, -inf
        %354 = vmax.xlane.f32.xlu0 %v353
        %v355 = vpop.xlane.xlu0 %354
        %v356 = vsub.f32 %v345, %v352
        %v357 = vsub.f32 %v347, %v355
        %v358 = vmul.f32 %v356, 1.442695
        %v359 = vpow.pop %v358
        %v360 = vmul.f32 %v357, 1.442695
        %v361 = vpow.pop %v360
        %v362 = vsel %vm349, %v359, 0.0
        %363 = vadd.xlane.f32.xlu0 %v362
        %v364 = vpop.xlane.xlu0 %363
        %v365 = vsel %vm349, %v361, 0.0
        %366 = vadd.xlane.f32.xlu0 %v365
        %v367 = vpop.xlane.xlu0 %366
        %v368 = vrcp.pop %v364
        %v369 = vmul.f32 %v364, %v368
        %v370 = vsub.f32 1.0, %v369
        %v371 = vmul.f32 %v368, %v370
        %v372 = vadd.f32 %v368, %v371
        %vm373 = vweird.f32 %v364
        %vm374 = vweird.f32 %v368
        %vm375 = vmor %vm373, %vm374
        %v376 = vsel %vm375, %v368, %v372
        %v377 = vand.u32 2147483647, %v364
        %vm378 = vcmp.eq.f32.partialorder %v377, 8.507059e+37
        %v379 = vand.u32 %v364, 2147483648
        %v380 = vor.u32 1.1754944e-38, %v379
        %v381 = vsel %vm378, %v380, %v376
        %v382 = vmul.f32 %v359, %v381
        %v383 = vrcp.pop %v367
        %v384 = vmul.f32 %v367, %v383
        %v385 = vsub.f32 1.0, %v384
        %v386 = vmul.f32 %v383, %v385
        %v387 = vadd.f32 %v383, %v386
        %vm388 = vweird.f32 %v367
        %vm389 = vweird.f32 %v383
        %vm390 = vmor %vm388, %vm389
        %v391 = vsel %vm390, %v383, %v387
        %v392 = vand.u32 2147483647, %v367
        %vm393 = vcmp.eq.f32.partialorder %v392, 8.507059e+37
        %v394 = vand.u32 %v367, 2147483648
        %v395 = vor.u32 1.1754944e-38, %v394
        %v396 = vsel %vm393, %v395, %v391
        %v397 = vmul.f32 %v361, %v396
        %v398 = vpack.c.bf16 %v382, %v382
        %v399 = vpack.c.bf16 %v397, %v397
        %v402 = vunpack.c.l.b16 %v398
        %v403 = vunpack.c.l.b16 %v399
        %v404 = vpack.c.b16 %v403, %v402
        %405 = vrot.lane.b32.xlu0 %v326, 64
        %v406 = vpop.permute.xlu0 %405
        %v409 = vsel %vm349, %v404, 0
        %411 = vmatpush.bf16.msra.mxu0 0
        %412 = vmatpush.bf16.msra.mxu0 0
        %413 = vmatpush.bf16.msra.mxu0 0
        %414 = vmatpush.bf16.msra.mxu0 0
        %415 = vmatpush.bf16.msra.mxu0 0
        %416 = vmatpush.bf16.msra.mxu0 0
        %417 = vmatpush.bf16.msra.mxu0 0
        %418 = vmatpush.bf16.msra.mxu0 %v406
        %419 = vmatmul.bf16.gmra.mxu0 %v409
        %v420 = vpop.f32.mrf.mxu0
        %v421 = vadd.f32 0.0, %v420
        %v422 = vpop.f32.mrf.mxu0
        %v423 = vadd.f32 0.0, %v422
        %424 = vdwg.mxu0
        %v425 = vpack.c.bf16 %v423, %v421
        %v426 = vld [vmem:[#allocation7] sm:$0xf]
        %v427 = vld [vmem:[#allocation7 + $0x4] sm:$0xf]
        %v428 = vld [vmem:[#allocation7 + $0x8] sm:$0xf]
        %v429 = vld [vmem:[#allocation7 + $0xc] sm:$0xf]
        %v430 = vld [vmem:[%s4] sm:$0x1]
        %v432 = vperm.slane %v430, 0
        %v438 = vunpack.c.l.b16 %v426
        %v439 = vunpack.c.l.b16 %v427
        %v440 = vunpack.c.l.b16 %v428
        %v441 = vunpack.c.l.b16 %v429
        %v442 = vpack.c.b16 %v439, %v438
        %v443 = vpack.c.b16 %v441, %v440
        %v447 = vsel %vm302, %v425, 0
        %449 = vmatpush.bf16.msra.mxu0 0
        %450 = vmatpush.bf16.msra.mxu0 0
        %451 = vmatpush.bf16.msra.mxu0 0
        %452 = vmatpush.bf16.msra.mxu0 0
        %453 = vmatpush.bf16.msra.mxu0 0
        %454 = vmatpush.bf16.msra.mxu0 0
        %455 = vmatpush.bf16.msra.mxu0 %v443
        %456 = vmatpush.bf16.msra.mxu0 %v442
        %457 = vmatmul.bf16.gmra.mxu0 %v447
        %v458 = vpop.f32.mrf.mxu0
        %v459 = vadd.f32 %v432, %v458
        %v460 = vpop.f32.mrf.mxu0
        %v461 = vadd.f32 %v432, %v460
        %462 = vdwg.mxu0
        %v463 = vadd.f32 %v459, %v279
        %v464 = vadd.f32 %v461, %v280
        %465 = vst.msk [vmem:[%s277] sm:$0xff] %vm302, %v463
        %466 = vst.msk [vmem:[%s277 + $0x8] sm:$0xff] %vm302, %v464
        %s467 = sand.u32 %s141, 1
        %s468 = scalar_lea.sflag [#allocation4], %s467
        %s469 = sand.u32 %s141, 1
        %s470 = smul.addr %s469, 16
        %s471 = scalar_lea.vmem [#allocation8], %s470
        // Predicated region
        $region53: #{tpu_custom_call.1} parent=39 // pred_check
          %p472 = pneg %p151
        $region54: #{tpu_custom_call.1} parent=39 // pred_check_branch
          %474 = sbr.rel (%p472) target = $region56
        $region55: #{tpu_custom_call.1} parent=39 // pred_region
          %476 = vsyncadd %s468, 0
          %s477 = smul.addr %s23, 2
          %s478 = smul.addr %s477, 8
          %s479 = scalar_lea.hbm %s5, %s478
          %s480 = sshll.u32 %s471, 4
          %s481 = int_to_ptr.vmem [resolvable:$true] %s480
          %s482 = sshll.u32 %s479, 4
          %s483 = int_to_ptr.hbm [resolvable:$true] %s482
          %488 = dma.vmem_to_hbm [thread:$0]  %s481, 256, %s483, %s468, 128, 128, 8
        $region56: #{tpu_custom_call.1} parent=39 // pred_fallthru
          _
      $region40: #{tpu_custom_call.1} parent=5 // pred_fallthru
        _
      %p489 = scmp.le.s32.totalorder 2, %s18
      // Predicated region
      $region57: #{tpu_custom_call.1} parent=5 // pred_check
        %p490 = pneg %p489
      $region58: #{tpu_custom_call.1} parent=5 // pred_check_branch
        %492 = sbr.rel (%p490) target = $region60
      $region59: #{tpu_custom_call.1} parent=5 // pred_region
        %s493 = ssub.s32 %s18, 2
        // Predicated region
        $region61: #{tpu_custom_call.1} parent=59 // pred_check
          %p494 = pneg %p157
        $region62: #{tpu_custom_call.1} parent=59 // pred_check_branch
          %496 = sbr.rel (%p494) target = $region64
        $region63: #{tpu_custom_call.1} parent=59 // pred_region
          %s497 = sand.u32 %s142, 1
          %s498 = scalar_lea.sflag [#allocation4], %s497
          %s499 = sand.u32 %s142, 1
          %s500 = smul.addr %s499, 16
          %s501 = scalar_lea.vmem [#allocation8], %s500
          %503 = dma.done %s498, 256
        $region64: #{tpu_custom_call.1} parent=59 // pred_fallthru
          _
      $region60: #{tpu_custom_call.1} parent=5 // pred_fallthru
        _
    $region6: #{tpu_custom_call.1} parent=1 // loop_footer
      %s22 = sadd.s32 1, %s18
    $region7: #{tpu_custom_call.1} parent=1 // loop_footer_branch
      %17 = sbr.rel target = $region3
    $region8: #{tpu_custom_call.1} parent=1 // loop_exit
      _
    %504 = vsyncpa [#allocation3], 1
    %s505 = scalar_lea.sflag [#allocation3], 1
    %506 = vsyncpa %s505, 1
    %507 = vsyncpa [#allocation6], 1
    %508 = vsyncpa [#allocation4], 1
    %s509 = scalar_lea.sflag [#allocation4], 1
    %510 = vsyncpa %s509, 1

</llo_original>
